<compile_context>
chip_gen: v5e
topology: v5e:2x2
jax: 0.10.0
libtpu: 0.0.40
codegen_flags: <defaults>
</compile_context>

<pallas_src>
import jax
import jax.numpy as jnp
from jax import lax
from jax.experimental import pallas as pl
from jax.experimental.pallas import tpu as pltpu


def _pick_tile(dim, preferred, align):
    """Largest tile <= preferred that divides dim and is a multiple of align
    (falls back to the full dim, which always satisfies Mosaic's layout rule)."""
    if dim <= preferred:
        return dim
    t = (preferred // align) * align
    while t >= align:
        if dim % t == 0:
            return t
        t -= align
    return dim


# --------------------------------------------------------------------------- #
# Phase 1: streamed argmax over the vocab axis                                 #
# --------------------------------------------------------------------------- #
def argmax_kernel(iw_ref, idx_ref, m_ref, arg_ref):
    # iw_ref : (1, tS, tV) f32 logits tile
    # idx_ref: (1, tS, 1)  int32 output (argmax over full V)
    # m_ref  : (tS, 1) f32  running max        (VMEM scratch)
    # arg_ref: (tS, 1) int32 running arg-max   (VMEM scratch)
    v = pl.program_id(2)

    iw = iw_ref[0]                                        # (tS, tV)
    # torch.argmax treats NaN as the maximum -> map NaN to +inf (first wins).
    iw = jnp.where(jnp.isnan(iw), jnp.inf, iw)

    tS, tV = iw.shape
    tile_max = jnp.max(iw, axis=-1, keepdims=True)        # (tS, 1)
    lane_iota = lax.broadcasted_iota(jnp.int32, (tS, tV), 1)
    local_arg = jnp.min(jnp.where(iw == tile_max, lane_iota, tV),
                        axis=-1, keepdims=True)           # first max in tile
    global_arg = local_arg + v * tV                       # (tS, 1) int32

    @pl.when(v == 0)
    def _():
        m_ref[...] = jnp.full_like(m_ref, -jnp.inf)
        arg_ref[...] = jnp.zeros_like(arg_ref)

    # strict ">" keeps the earliest vocab tile on ties (torch first-occurrence).
    upd = tile_max > m_ref[...]
    m_ref[...] = jnp.where(upd, tile_max, m_ref[...])
    arg_ref[...] = jnp.where(upd, global_arg, arg_ref[...])

    @pl.when(v == pl.num_programs(2) - 1)
    def _():
        idx_ref[0] = arg_ref[...]


# --------------------------------------------------------------------------- #
# Phase 2: cross-step double-buffered DMA row-gather + positional-emb add      #
# --------------------------------------------------------------------------- #
def gather_add_kernel(idx_ref, table_ref, pos_ref, out_ref, rows_ref, sem):
    # idx_ref  : SMEM (B*S,) int32  argmax indices (scalar prefetch, flat 1-D)
    # table_ref: HBM  (V, D)        embedding table (memory_space=pl.ANY)
    # pos_ref  : VMEM (tS2, D)      positional-embedding tile
    # out_ref  : VMEM (tS2, D)
    # rows_ref : VMEM (2, tS2, D)   double-buffered gathered rows
    # sem      : DMA semaphores (2, tS2)
    t = pl.program_id(0)
    nsteps = pl.num_programs(0)
    tS2 = rows_ref.shape[1]
    slot = lax.rem(t, 2)
    nslot = 1 - slot

    def issue(step, sl):
        base = step * tS2
        for j in range(tS2):
            row = idx_ref[base + j]
            pltpu.make_async_copy(table_ref.at[row],
                                  rows_ref.at[sl, j],
                                  sem.at[sl, j]).start()

    # Prime the pipeline: only the very first step issues its own gathers cold.
    @pl.when(t == 0)
    def _():
        issue(t, slot)

    # Prefetch the *next* step's rows into the other buffer half before waiting
    # on this step's — hides the gather DMA latency behind this step's work.
    @pl.when(t + 1 < nsteps)
    def _():
        issue(t + 1, nslot)

    # Wait on this step's rows (descriptor rebuilt with the actual source row).
    base = t * tS2
    for j in range(tS2):
        row = idx_ref[base + j]
        pltpu.make_async_copy(table_ref.at[row],
                              rows_ref.at[slot, j],
                              sem.at[slot, j]).wait()

    out_ref[...] = (rows_ref[slot] + pos_ref[...]).astype(out_ref.dtype)


# --------------------------------------------------------------------------- #
# Wrapper                                                                      #
# --------------------------------------------------------------------------- #
def token_dict_forward(index_weights, emb_table, pos_emb, start_pos=0):
    B, S, V = index_weights.shape
    Vt, D = emb_table.shape
    assert Vt == V
    iw_bytes = jnp.dtype(index_weights.dtype).itemsize
    emb_bytes = jnp.dtype(emb_table.dtype).itemsize

    # ---------------- Phase 1: argmax indices ---------------- #
    tS = _pick_tile(S, 256, 8)
    # target ~8 MiB logits block, tV capped at 8192 (amortizes per-step overhead)
    tv_pref = max(128, min(8192, ((8 << 20) // max(1, tS * iw_bytes)) // 128 * 128))
    tV = _pick_tile(V, tv_pref, 128)
    # VMEM limit from actual need (2x double-buffered block + headroom), not 64 MiB.
    p1_vmem = 2 * tS * tV * iw_bytes + (8 << 20)

    idx = pl.pallas_call(
        argmax_kernel,
        out_shape=jax.ShapeDtypeStruct((B, S, 1), jnp.int32),
        grid_spec=pltpu.PrefetchScalarGridSpec(
            num_scalar_prefetch=0,
            grid=(B, S // tS, V // tV),
            in_specs=[pl.BlockSpec((1, tS, tV), lambda b, s, v: (b, s, v))],
            out_specs=pl.BlockSpec((1, tS, 1), lambda b, s, v: (b, s, 0)),
            scratch_shapes=[pltpu.VMEM((tS, 1), jnp.float32),
                            pltpu.VMEM((tS, 1), jnp.int32)],
        ),
        compiler_params=pltpu.CompilerParams(
            dimension_semantics=("parallel", "parallel", "arbitrary"),
            vmem_limit_bytes=int(p1_vmem)),
        cost_estimate=pl.CostEstimate(
            flops=3 * B * S * V, transcendentals=0,
            bytes_accessed=B * S * V * iw_bytes + B * S * 4),
    )(index_weights)
    # flat 1-D index array -> avoids 2-D SMEM padding blowup in Phase 2
    idx = idx.reshape(B * S)

    # ---------------- Phase 2: gather + pos-emb ---------------- #
    pos_slice = lax.dynamic_slice(pos_emb, (start_pos, 0), (S, D))

    tS2 = _pick_tile(S, 128, 8)        # rows gathered (and DMAs in flight) per step
    nS = S // tS2
    nsteps = (B * S) // tS2            # flat sequential grid over row tiles

    out = pl.pallas_call(
        gather_add_kernel,
        out_shape=jax.ShapeDtypeStruct((B * S, D), emb_table.dtype),
        grid_spec=pltpu.PrefetchScalarGridSpec(
            num_scalar_prefetch=1,                      # idx -> SMEM
            grid=(nsteps,),
            in_specs=[
                pl.BlockSpec(memory_space=pl.ANY),      # table stays in HBM
                pl.BlockSpec((tS2, D), lambda t, idx: (t % nS, 0)),
            ],
            out_specs=pl.BlockSpec((tS2, D), lambda t, idx: (t, 0)),
            scratch_shapes=[pltpu.VMEM((2, tS2, D), emb_table.dtype),
                            pltpu.SemaphoreType.DMA((2, tS2))],
        ),
        # "arbitrary": the cross-step prefetch chain requires strictly sequential
        # grid execution on one core.
        compiler_params=pltpu.CompilerParams(
            dimension_semantics=("arbitrary",)),
        cost_estimate=pl.CostEstimate(
            flops=B * S * D, transcendentals=0,
            bytes_accessed=(2 * B * S * D + S * D) * emb_bytes + B * S * 4),
    )(idx, emb_table, pos_slice)

    return out.reshape(B, S, D)


if __name__ == "__main__":
    # Small, deterministic setup consistent with the module's forward.
    B, S = 2, 8
    vocab_size, embedding_dim, max_seq_len = 32, 32, 16
    start_pos = 2

    key = jax.random.PRNGKey(0)
    k_iw, k_emb, k_pos = jax.random.split(key, 3)

    index_weights = jax.random.normal(k_iw, (B, S, vocab_size), dtype=jnp.float32)
    # nn.Embedding default init: N(0, 1)
    emb_table = jax.random.normal(k_emb, (vocab_size, embedding_dim),
                                  dtype=jnp.float32)
    # learned 1D positional embedding table (max_seq_len, D)
    pos_emb = 0.02 * jax.random.normal(k_pos, (max_seq_len, embedding_dim),
                                       dtype=jnp.float32)

    out = token_dict_forward(index_weights, emb_table, pos_emb, start_pos=start_pos)
    out = jax.block_until_ready(out)

    # reference (pure JAX) check of semantics
    idx_ref = jnp.argmax(index_weights, axis=-1)
    ref = emb_table[idx_ref] + pos_emb[start_pos:start_pos + S][None]
    assert out.shape == (B, S, embedding_dim)
    assert jnp.allclose(out, ref, atol=1e-5), "mismatch vs reference"

    print("KERNEL_OK")
</pallas_src>

<mosaic_0001>
module attributes {stable_mosaic.version = 11 : i64} {
  func.func @argmax_kernel(%arg0: i32, %arg1: i32, %arg2: i32, %arg3: memref<1x8x32xf32, #tpu.memory_space<vmem>>, %arg4: memref<1x8x1xi32, #tpu.memory_space<vmem>>, %arg5: memref<8x1xf32, #tpu.memory_space<vmem>>, %arg6: memref<8x1xi32, #tpu.memory_space<vmem>>) attributes {dimension_semantics = [#tpu.dimension_semantics<parallel>, #tpu.dimension_semantics<parallel>, #tpu.dimension_semantics<arbitrary>], iteration_bounds = array<i64: 2, 1, 1>, scalar_prefetch = 0 : i64, scratch_operands = 2 : i64, tpu.core_type = #tpu.core_type<tc>, window_params = [{transform_indices = @transform_0, window_bounds = array<i64: 1, 8, 32>}, {transform_indices = @transform_1, window_bounds = array<i64: 1, 8, 1>}]} {
    %c0 = arith.constant 0 : index
    %c0_0 = arith.constant 0 : index
    %c0_1 = arith.constant 0 : index
    %0 = vector.load %arg3[%c0, %c0_0, %c0_1] : memref<1x8x32xf32, #tpu.memory_space<vmem>>, vector<1x8x32xf32>
    %1 = vector.shape_cast %0 : vector<1x8x32xf32> to vector<8x32xf32>
    %2 = arith.cmpf one, %1, %1 : vector<8x32xf32>
    %cst = arith.constant 0x7F800000 : f32
    %3 = vector.broadcast %cst : f32 to vector<8x32xf32>
    %4 = arith.select %2, %3, %1 : vector<8x32xi1>, vector<8x32xf32>
    %cst_2 = arith.constant dense<0xFF800000> : vector<8xf32>
    %5 = vector.multi_reduction <maximumf>, %4, %cst_2 [1] : vector<8x32xf32> to vector<8xf32>
    %6 = vector.shape_cast %5 : vector<8xf32> to vector<8x1xf32>
    %7 = tpu.iota {dimensions = array<i32: 1>} : vector<8x32xi32>
    %8 = vector.broadcast %6 : vector<8x1xf32> to vector<8x32xf32>
    %9 = arith.cmpf oeq, %4, %8 : vector<8x32xf32>
    %c32_i32 = arith.constant 32 : i32
    %10 = vector.broadcast %c32_i32 : i32 to vector<8x32xi32>
    %11 = arith.select %9, %7, %10 : vector<8x32xi1>, vector<8x32xi32>
    %cst_3 = arith.constant dense<2147483647> : vector<8xi32>
    %12 = vector.multi_reduction <minsi>, %11, %cst_3 [1] : vector<8x32xi32> to vector<8xi32>
    %13 = vector.shape_cast %12 : vector<8xi32> to vector<8x1xi32>
    %c32_i32_4 = arith.constant 32 : i32
    %14 = arith.muli %arg2, %c32_i32_4 : i32
    %15 = vector.broadcast %14 : i32 to vector<8x1xi32>
    %16 = arith.addi %13, %15 : vector<8x1xi32>
    %c0_i32 = arith.constant 0 : i32
    %17 = arith.cmpi eq, %arg2, %c0_i32 : i32
    %18 = arith.extui %17 : i1 to i32
    %c0_i32_5 = arith.constant 0 : i32
    %19 = arith.cmpi ne, %18, %c0_i32_5 : i32
    scf.if %19 {
      %cst_18 = arith.constant 0xFF800000 : f32
      %31 = vector.broadcast %cst_18 : f32 to vector<8x1xf32>
      %c0_19 = arith.constant 0 : index
      %c0_20 = arith.constant 0 : index
      %32 = vector.load %arg5[%c0_19, %c0_20] : memref<8x1xf32, #tpu.memory_space<vmem>>, vector<8x1xf32>
      tpu.vector_store %arg5[%c0_19, %c0_20], %31 {strides = array<i32>} : memref<8x1xf32, #tpu.memory_space<vmem>>, vector<8x1xf32>,
      %c0_i32_21 = arith.constant 0 : i32
      %33 = vector.broadcast %c0_i32_21 : i32 to vector<8x1xi32>
      %c0_22 = arith.constant 0 : index
      %c0_23 = arith.constant 0 : index
      %34 = vector.load %arg6[%c0_22, %c0_23] : memref<8x1xi32, #tpu.memory_space<vmem>>, vector<8x1xi32>
      tpu.vector_store %arg6[%c0_22, %c0_23], %33 {strides = array<i32>} : memref<8x1xi32, #tpu.memory_space<vmem>>, vector<8x1xi32>,
    } else {
    }
    %c0_6 = arith.constant 0 : index
    %c0_7 = arith.constant 0 : index
    %20 = vector.load %arg5[%c0_6, %c0_7] : memref<8x1xf32, #tpu.memory_space<vmem>>, vector<8x1xf32>
    %21 = arith.cmpf ogt, %6, %20 : vector<8x1xf32>
    %c0_8 = arith.constant 0 : index
    %c0_9 = arith.constant 0 : index
    %22 = vector.load %arg5[%c0_8, %c0_9] : memref<8x1xf32, #tpu.memory_space<vmem>>, vector<8x1xf32>
    %23 = arith.select %21, %6, %22 : vector<8x1xi1>, vector<8x1xf32>
    %c0_10 = arith.constant 0 : index
    %c0_11 = arith.constant 0 : index
    %24 = vector.load %arg5[%c0_10, %c0_11] : memref<8x1xf32, #tpu.memory_space<vmem>>, vector<8x1xf32>
    tpu.vector_store %arg5[%c0_10, %c0_11], %23 {strides = array<i32>} : memref<8x1xf32, #tpu.memory_space<vmem>>, vector<8x1xf32>,
    %c0_12 = arith.constant 0 : index
    %c0_13 = arith.constant 0 : index
    %25 = vector.load %arg6[%c0_12, %c0_13] : memref<8x1xi32, #tpu.memory_space<vmem>>, vector<8x1xi32>
    %26 = arith.select %21, %16, %25 : vector<8x1xi1>, vector<8x1xi32>
    %c0_14 = arith.constant 0 : index
    %c0_15 = arith.constant 0 : index
    %27 = vector.load %arg6[%c0_14, %c0_15] : memref<8x1xi32, #tpu.memory_space<vmem>>, vector<8x1xi32>
    tpu.vector_store %arg6[%c0_14, %c0_15], %26 {strides = array<i32>} : memref<8x1xi32, #tpu.memory_space<vmem>>, vector<8x1xi32>,
    %c0_i32_16 = arith.constant 0 : i32
    %28 = arith.cmpi eq, %arg2, %c0_i32_16 : i32
    %29 = arith.extui %28 : i1 to i32
    %c0_i32_17 = arith.constant 0 : i32
    %30 = arith.cmpi ne, %29, %c0_i32_17 : i32
    scf.if %30 {
      %c0_18 = arith.constant 0 : index
      %c0_19 = arith.constant 0 : index
      %31 = vector.load %arg6[%c0_18, %c0_19] : memref<8x1xi32, #tpu.memory_space<vmem>>, vector<8x1xi32>
      %c0_20 = arith.constant 0 : index
      %c0_21 = arith.constant 0 : index
      %c0_22 = arith.constant 0 : index
      %32 = vector.load %arg4[%c0_20, %c0_21, %c0_22] : memref<1x8x1xi32, #tpu.memory_space<vmem>>, vector<1x8x1xi32>
      %33 = vector.shape_cast %32 : vector<1x8x1xi32> to vector<8x1xi32>
      %34 = vector.shape_cast %31 : vector<8x1xi32> to vector<1x8x1xi32>
      tpu.vector_store %arg4[%c0_20, %c0_21, %c0_22], %34 {strides = array<i32>} : memref<1x8x1xi32, #tpu.memory_space<vmem>>, vector<1x8x1xi32>,
    } else {
    }
    return
  }
  func.func @transform_0(%arg0: i32, %arg1: i32, %arg2: i32) -> (i32, i32, i32) {
    %c0_i32 = arith.constant 0 : i32
    return %arg0, %arg1, %arg2 : i32, i32, i32
  }
  func.func @transform_1(%arg0: i32, %arg1: i32, %arg2: i32) -> (i32, i32, i32) {
    %c0_i32 = arith.constant 0 : i32
    %c0_i32_0 = arith.constant 0 : i32
    return %arg0, %arg1, %c0_i32 : i32, i32, i32
  }
}

</mosaic_0001>

<llo_original>
// kernel: tpu_custom_call.1
$region0: #{tpu_custom_call.1}
  #allocation0 [shape = 'u32[]', space=smem, size = 0x4, offset = 0x4, fixed_abs, tag = 'smem constant byte address 0x4 - core index']
  #allocation1 [shape = 'u32[72,128]{1,0:T(1,128)}', space=vmem, size = 0x9000, scoped, tag = 'internal scratch']
  #allocation2 [shape = 'f32[8,1]{1,0:T(8,128)}', space=vmem, size = 0x1000, scoped, tag = 'scratch operand']
  #allocation3 [shape = 's32[8,1]{1,0:T(8,128)}', space=vmem, size = 0x1000, scoped, tag = 'scratch operand']
  %s0 = inlined_call_operand.hbm [shape: f32[2,8,32], index: 0, kind: input, shape index: {}]
  %s1 = inlined_call_operand.vmem [shape: s32[2,8,1], index: 1, kind: output, shape index: {}]
  %s2 = sld [smem:[#allocation0]]
  $region49: #{tpu_custom_call.1} parent=0
    _
  %s4 = ssub.s32 1, %s2
  %s5 = scalar_select 0, %s4, %s2
  $region1: #{tpu_custom_call.1} parent=0
    #allocation4 [shape = 'u8[8192]{0}', space=vmem, size = 0x2000, scoped, tag = 'input window, operand 0']
    #allocation5 [shape = 's32[2]{0}', space=sflag, size = 0x8, scoped, tag = 'scoped memory for tpu_custom_call.1']
    %6 = vsyncpa [#allocation5], 0
    %s7 = scalar_lea.sflag [#allocation5], 1
    %8 = vsyncpa %s7, 0
    loop: start=0, step=1, limit=4
    $region2: #{tpu_custom_call.1} parent=1 // loop_pre_header
      _
    $region3: #{tpu_custom_call.1} parent=1 // loop_header
      %s10 = sphi 0, %s14
      %p11 = scmp.ge.s32.totalorder %s10, 4
      %s17 = sphi 0, %s36
      %s18 = sphi 0, %s32
      %s19 = sphi 0, %s28
      %s20 = sphi 0, %s17
      %s21 = sphi 0, %s18
      %s22 = sphi 0, %s19
      %s23 = sphi 0, %s20
      %s24 = sphi 0, %s21
      %s25 = sphi 0, %s22
      %s43 = sphi 0, %s45
      %s46 = sphi 0, %s43
      %s47 = sphi 0, %s46
      %s63 = sphi 0, %s47
      %s71 = sphi 0, %s73
      %s74 = sphi 0, %s71
      %s75 = sphi 0, %s74
      %s91 = sphi 0, %s75
    $region4: #{tpu_custom_call.1} parent=1 // loop_header_branch
      %13 = sbr.rel (%p11) target = $region8
    $region5: #{tpu_custom_call.1} parent=1 // loop_body
      %s15 = ssub.s32 %s10, 1
      %s16 = ssub.s32 %s10, 2
      %s26 = sadd.s32 1, %s19
      %p27 = scmp.ge.s32.totalorder %s26, 1
      %s28 = scalar_select %p27, 0, %s26
      %s29 = sadd.s32 1, %s18
      %s30 = scalar_select %p27, %s29, %s18
      %p31 = scmp.ge.s32.totalorder %s30, 1
      %s32 = scalar_select %p31, 0, %s30
      %s33 = sadd.s32 1, %s17
      %s34 = scalar_select %p31, %s33, %s17
      %p35 = scmp.ge.s32.totalorder %s34, 2
      %s36 = scalar_select %p35, 0, %s34
      %s37 = ssub.s32 %s17, %s36
      %s38 = ssub.s32 %s18, %s32
      %s39 = sor.u32 %s37, %s38
      %s40 = ssub.s32 %s19, %s28
      %s41 = sor.u32 %s39, %s40
      %p42 = scmp.eq.s32.totalorder %s41, 0
      %s44 = sadd.s32 %s43, 1
      %s45 = scalar_select %p42, %s43, %s44
      %p48 = pneg %p42
      %p49 = scmp.eq.s32.totalorder %s10, 1
      %p50 = por %p48, %p49
      %p51 = scmp.ne.s32.totalorder %s43, %s46
      %p52 = scmp.eq.s32.totalorder %s10, 0
      %p53 = por %p51, %p52
      %p54 = scmp.ne.s32.totalorder %s43, %s46
      %p55 = scmp.eq.s32.totalorder %s15, 1
      %p56 = por %p54, %p55
      %p57 = scmp.ne.s32.totalorder %s46, %s47
      %p58 = scmp.eq.s32.totalorder %s15, 0
      %p59 = por %p57, %p58
      %p60 = scmp.ne.s32.totalorder %s46, %s47
      %p61 = scmp.eq.s32.totalorder %s16, 1
      %p62 = por %p60, %p61
      %p64 = scmp.ne.s32.totalorder %s47, %s63
      %p65 = scmp.eq.s32.totalorder %s16, 0
      %p66 = por %p64, %p65
      %s67 = ssub.s32 %s17, %s36
      %s68 = ssub.s32 %s18, %s32
      %s69 = sor.u32 %s67, %s68
      %p70 = scmp.eq.s32.totalorder %s69, 0
      %s72 = sadd.s32 %s71, 1
      %s73 = scalar_select %p70, %s71, %s72
      %p76 = pneg %p70
      %p77 = scmp.eq.s32.totalorder %s10, 1
      %p78 = por %p76, %p77
      %p79 = scmp.ne.s32.totalorder %s71, %s74
      %p80 = scmp.eq.s32.totalorder %s10, 0
      %p81 = por %p79, %p80
      %p82 = scmp.ne.s32.totalorder %s71, %s74
      %p83 = scmp.eq.s32.totalorder %s15, 1
      %p84 = por %p82, %p83
      %p85 = scmp.ne.s32.totalorder %s74, %s75
      %p86 = scmp.eq.s32.totalorder %s15, 0
      %p87 = por %p85, %p86
      %p88 = scmp.ne.s32.totalorder %s74, %s75
      %p89 = scmp.eq.s32.totalorder %s16, 1
      %p90 = por %p88, %p89
      %p92 = scmp.ne.s32.totalorder %s75, %s91
      %p93 = scmp.eq.s32.totalorder %s16, 0
      %p94 = por %p92, %p93
      %p95 = scmp.le.s32.totalorder 1, %s10
      %p96 = scmp.lt.s32.totalorder %s10, 3
      %p97 = pnand %p95, %p96
      %p98 = pneg %p97
      // Predicated region
      $region9: #{tpu_custom_call.1} parent=5 // pred_check
        _
      $region10: #{tpu_custom_call.1} parent=5 // pred_check_branch
        %100 = sbr.rel (%p97) target = $region12
      $region11: #{tpu_custom_call.1} parent=5 // pred_region
        %s101 = ssub.s32 %s10, 1
      $region12: #{tpu_custom_call.1} parent=5 // pred_fallthru
        _
      %p102 = scmp.lt.s32.totalorder %s10, 2
      // Predicated region
      $region13: #{tpu_custom_call.1} parent=5 // pred_check
        %p103 = pneg %p102
      $region14: #{tpu_custom_call.1} parent=5 // pred_check_branch
        %105 = sbr.rel (%p103) target = $region16
      $region15: #{tpu_custom_call.1} parent=5 // pred_region
        // Predicated region
        $region17: #{tpu_custom_call.1} parent=15 // pred_check
          %p106 = pneg %p53
        $region18: #{tpu_custom_call.1} parent=15 // pred_check_branch
          %108 = sbr.rel (%p106) target = $region20
        $region19: #{tpu_custom_call.1} parent=15 // pred_region
          %s109 = sand.u32 %s43, 1
          %s110 = scalar_lea.sflag [#allocation5], %s109
          %s111 = sand.u32 %s43, 1
          %s112 = smul.addr %s111, 8
          %s113 = scalar_lea.vmem [#allocation4], %s112
          %115 = vsyncadd %s110, 0
          %s116 = sadd.s32 %s19, %s18
          %s117 = sadd.s32 %s116, %s17
          %s118 = smul.addr %s117, 8
          %s119 = scalar_lea.hbm %s0, %s118
          %s121 = sshll.u32 %s119, 4
          %s122 = int_to_ptr.hbm [resolvable:$true] %s121
          %s123 = sshll.u32 %s113, 4
          %s124 = int_to_ptr.vmem [resolvable:$true] %s123
          %126 = dma.hbm_to_vmem [thread:$0]  %s122, 128, %s124, %s110
        $region20: #{tpu_custom_call.1} parent=15 // pred_fallthru
          _
      $region16: #{tpu_custom_call.1} parent=5 // pred_fallthru
        _
      %p127 = scmp.le.s32.totalorder 1, %s10
      %p128 = scmp.lt.s32.totalorder %s10, 3
      %p129 = pnand %p127, %p128
      %p130 = pneg %p129
      // Predicated region
      $region21: #{tpu_custom_call.1} parent=5 // pred_check
        _
      $region22: #{tpu_custom_call.1} parent=5 // pred_check_branch
        %132 = sbr.rel (%p129) target = $region24
      $region23: #{tpu_custom_call.1} parent=5 // pred_region
        %s133 = ssub.s32 %s10, 1
        %s134 = sand.u32 %s46, 1
        %s135 = scalar_lea.sflag [#allocation5], %s134
        %s136 = sand.u32 %s46, 1
        %s137 = smul.addr %s136, 8
        %s138 = scalar_lea.vmem [#allocation4], %s137
        // Predicated region
        $region25: #{tpu_custom_call.1} parent=23 // pred_check
          %p139 = pneg %p59
        $region26: #{tpu_custom_call.1} parent=23 // pred_check_branch
          %141 = sbr.rel (%p139) target = $region28
        $region27: #{tpu_custom_call.1} parent=23 // pred_region
          %143 = dma.done %s135, 128
        $region28: #{tpu_custom_call.1} parent=23 // pred_fallthru
          _
        %s144 = sand.u32 %s46, 1
        %s145 = scalar_lea.sflag [#allocation5], %s144
        %s146 = sand.u32 %s46, 1
        %s147 = smul.addr %s146, 8
        %s148 = scalar_lea.vmem [#allocation4], %s147
        %p149 = pneg %p59
        %p150 = pneg %p56
        %p151 = pneg %p87
        %p152 = pneg %p84
        %p153 = scmp.lt.s32.totalorder %s20, 1
        %s154 = scalar_select %p153, %s20, 1
        %p155 = scmp.lt.s32.totalorder %s21, 0
        %s156 = scalar_select %p155, %s21, 0
        %s157 = sadd.s32 %s156, %s154
        %s158 = smul.addr %s157, 8
        %s159 = scalar_lea.vmem %s1, %s158
        %p160 = scmp.lt.s32.totalorder %s20, 1
        %s161 = scalar_select %p160, %s20, 1
        %p162 = scmp.lt.s32.totalorder %s21, 0
        %s163 = scalar_select %p162, %s21, 0
        %s164 = sadd.s32 %s163, %s161
        %s165 = smul.addr %s164, 8
        %s166 = scalar_lea.vmem %s1, %s165
        %v167 = vld [vmem:[%s138] sm:$0xff]
        %vm168 = vcmp.ne.f32.partialorder %v167, %v167
        %v169 = vsel %vm168, inf, %v167
        %vm170 = vcmask 261120
        %v171 = vsel %vm170, %v169, -inf
        %172 = vmax.xlane.f32.xlu0 %v171
        %v173 = vpop.xlane.xlu0 %172
        %v174 = vlaneseq
        %v175 = vand.u32 %v174, 127
        %vm176 = vcmp.eq.f32.partialorder %v169, %v173
        %v177 = vsel %vm176, %v175, 32
        %v178 = vsel %vm170, %v177, 2147483647
        %v179 = vand.u32 %v178, 65535
        %v180 = vshra.s32 %v178, 16
        %v181 = vcvt.s32.f32 %v179
        %v182 = vcvt.s32.f32 %v180
        %183 = vmin.xlane.f32.xlu0 %v182
        %v184 = vpop.xlane.xlu0 %183
        %vm185 = vcmp.eq.f32.partialorder %v182, %v184
        %v186 = vsel %vm185, %v181, inf
        %187 = vmin.xlane.f32.xlu0 %v186
        %v188 = vpop.xlane.xlu0 %187
        %v189 = vcvt.f32.s32 %v188
        %v190 = vcvt.f32.s32 %v184
        %v191 = vshll.u32 %v190, 16
        %v192 = vadd.s32 %v191, %v189
        %s193 = smul.u32 %s22, 32
        %v194 = vstv %s193
        %v195 = vadd.s32 %v192, %v194
        %p196 = scmp.eq.s32.totalorder %s22, 0
        // Predicated region
        $region29: #{tpu_custom_call.1} parent=23 // pred_check
          %p197 = pneg %p196
        $region30: #{tpu_custom_call.1} parent=23 // pred_check_branch
          %199 = sbr.rel (%p197) target = $region32
        $region31: #{tpu_custom_call.1} parent=23 // pred_region
          %vm200 = vcmask 7168
          %201 = vst.msk [vmem:[#allocation2] sm:$0xff] %vm200, -inf
          %202 = vst.msk [vmem:[#allocation3] sm:$0xff] %vm200, 0
        $region32: #{tpu_custom_call.1} parent=23 // pred_fallthru
          _
        %v203 = vld [vmem:[#allocation2] sm:$0xff]
        %vm204 = vcmp.gt.f32.partialorder %v173, %v203
        %v205 = vsel %vm204, %v173, %v203
        %vm206 = vcmask 7168
        %207 = vst.msk [vmem:[#allocation2] sm:$0xff] %vm206, %v205
        %v208 = vld [vmem:[#allocation3] sm:$0xff]
        %v209 = vsel %vm204, %v195, %v208
        %210 = vst.msk [vmem:[#allocation3] sm:$0xff] %vm206, %v209
        // Predicated region
        $region33: #{tpu_custom_call.1} parent=23 // pred_check
          %p211 = pneg %p196
        $region34: #{tpu_custom_call.1} parent=23 // pred_check_branch
          %213 = sbr.rel (%p211) target = $region36
        $region35: #{tpu_custom_call.1} parent=23 // pred_region
          %v214 = vld [vmem:[#allocation3] sm:$0xff]
          %215 = vst.msk [vmem:[%s166] sm:$0xff] %vm206, %v214
        $region36: #{tpu_custom_call.1} parent=23 // pred_fallthru
          _
        %p216 = scmp.lt.s32.totalorder %s20, 1
        %s217 = scalar_select %p216, %s20, 1
        %p218 = scmp.lt.s32.totalorder %s21, 0
        %s219 = scalar_select %p218, %s21, 0
        %s220 = sadd.s32 %s219, %s217
        %s221 = smul.addr %s220, 8
        %s222 = scalar_lea.vmem %s1, %s221
        // Predicated region
        $region37: #{tpu_custom_call.1} parent=23 // pred_check
          %p223 = pneg %p84
        $region38: #{tpu_custom_call.1} parent=23 // pred_check_branch
          %225 = sbr.rel (%p223) target = $region40
        $region39: #{tpu_custom_call.1} parent=23 // pred_region
          _
        $region40: #{tpu_custom_call.1} parent=23 // pred_fallthru
          _
      $region24: #{tpu_custom_call.1} parent=5 // pred_fallthru
        _
      %p226 = scmp.le.s32.totalorder 2, %s10
      // Predicated region
      $region41: #{tpu_custom_call.1} parent=5 // pred_check
        %p227 = pneg %p226
      $region42: #{tpu_custom_call.1} parent=5 // pred_check_branch
        %229 = sbr.rel (%p227) target = $region44
      $region43: #{tpu_custom_call.1} parent=5 // pred_region
        %s230 = ssub.s32 %s10, 2
        // Predicated region
        $region45: #{tpu_custom_call.1} parent=43 // pred_check
          %p231 = pneg %p90
        $region46: #{tpu_custom_call.1} parent=43 // pred_check_branch
          %233 = sbr.rel (%p231) target = $region48
        $region47: #{tpu_custom_call.1} parent=43 // pred_region
          %p234 = scmp.lt.s32.totalorder %s23, 1
          %s235 = scalar_select %p234, %s23, 1
          %p236 = scmp.lt.s32.totalorder %s24, 0
          %s237 = scalar_select %p236, %s24, 0
          %s238 = sadd.s32 %s237, %s235
          %s239 = smul.addr %s238, 8
          %s240 = scalar_lea.vmem %s1, %s239
        $region48: #{tpu_custom_call.1} parent=43 // pred_fallthru
          _
      $region44: #{tpu_custom_call.1} parent=5 // pred_fallthru
        _
    $region6: #{tpu_custom_call.1} parent=1 // loop_footer
      %s14 = sadd.s32 1, %s10
    $region7: #{tpu_custom_call.1} parent=1 // loop_footer_branch
      %9 = sbr.rel target = $region3
    $region8: #{tpu_custom_call.1} parent=1 // loop_exit
      _
    %241 = vsyncpa [#allocation5], 1
    %s242 = scalar_lea.sflag [#allocation5], 1
    %243 = vsyncpa %s242, 1

</llo_original>
